<compile_context>
chip_gen: v7x
topology: tpu7x:2x2x1
jax: 0.10.0
libtpu: 0.0.40
codegen_flags: <defaults>
</compile_context>

<pallas_src>
import functools

import jax
import jax.numpy as jnp
from jax.experimental import pallas as pl
from jax.experimental.pallas import tpu as pltpu


def _pick_lane(n: int) -> int:
    """Largest divisor of n that is <= 128, preferring multiples of 8."""
    for g in range(128, 7, -8):          # 128, 120, ..., 8 (dense sublanes, 32B rows)
        if n % g == 0:
            return g
    for g in range(127, 0, -1):          # any divisor (rare: no multiple-of-8 factor)
        if n % g == 0:
            return g
    return 1


def _erase_kernel(ctrl_ref, x_hbm, o_hbm, fill_vmem, sem, *,
                  erase_value, n_erase, rows, chunk_rows, n_chunks):
    """Overwrite the chosen frames of the aliased output with `erase_value`.

    ctrl_ref : SMEM int32[1 + n_erase]; ctrl[0]=apply flag, ctrl[1:]=frame ids.
    x_hbm    : HBM ref [T, rows, lane]; aliased to o_hbm, never read.
    o_hbm    : HBM ref [T, rows, lane].
    fill_vmem: VMEM (chunk_rows, lane) scratch holding the fill value.
    sem      : DMA semaphores, shape (n_erase, n_chunks).
    """
    del x_hbm  # Present only for input/output aliasing; never read.

    @pl.when(ctrl_ref[0] > 0)
    def _():
        # Build the fill tile once, on-chip only (no HBM reads).
        fill_vmem[...] = jnp.full(fill_vmem.shape, erase_value, fill_vmem.dtype)

        # Hoist all SMEM scalar loads before any DMA start/wait so the wait
        # loop is pure semaphore waits (no sld interleaved with .wait()).
        frame_ids = [ctrl_ref[1 + i] for i in range(n_erase)]

        copies = []
        for i, t in enumerate(frame_ids):
            for c in range(n_chunks):
                r0 = c * chunk_rows                       # static
                nr = min(chunk_rows, rows - r0)           # static (tail chunk)
                copies.append(
                    pltpu.make_async_copy(
                        fill_vmem.at[pl.ds(0, nr), :],
                        o_hbm.at[t, pl.ds(r0, nr), :],
                        sem.at[i, c],
                    )
                )
        for cp in copies:   # issue every overwrite DMA first ...
            cp.start()
        for cp in copies:   # ... then wait, so all writes overlap.
            cp.wait()


def random_temporal_erasing(
    x: jax.Array,
    key: jax.Array,
    *,
    erase_prob: float = 0.5,
    num_frames_to_erase: int = 1,
    erase_value: float = 0.0,
    training: bool = True,
) -> jax.Array:
    """Pallas implementation of RandomTemporalErasing.forward. x: [T, C, H, W].

    NOTE: to make the erase truly in place (no HBM copy of the untouched
    frames), donate `x` at the jit boundary (jax.jit(..., donate_argnums=...)).
    Without donation the result is still correct; XLA just materializes a
    defensive copy of x to satisfy the output alias.
    """
    if not training:
        return x

    T = int(x.shape[0])
    n_erase = min(int(num_frames_to_erase), T)
    if n_erase <= 0:
        return x

    orig_shape = x.shape
    frame_elems = 1
    for d in x.shape[1:]:
        frame_elems *= int(d)
    if frame_elems == 0:
        return x

    # Lane-dense per-frame factorization: frame -> (rows, lane), lane <= 128.
    lane = _pick_lane(frame_elems)
    rows = frame_elems // lane
    x_r = x.reshape((T, rows, lane))

    # Fixed-size chunked fill tile: ~1 MiB payload (>= v5e's descriptor-overhead
    # knee), capped so the lane-padded VMEM footprint stays ~2 MiB on every
    # generation (well inside v5e/v6e/v7x scoped-VMEM defaults).
    dtype_bytes = jnp.dtype(x.dtype).itemsize
    target_chunk_bytes = 1 << 20
    max_padded_bytes = 2 << 20
    chunk_rows = min(
        rows,
        max(1, target_chunk_bytes // (lane * dtype_bytes)),
        max(1, max_padded_bytes // (128 * dtype_bytes)),
    )
    if chunk_rows >= 8:
        chunk_rows -= chunk_rows % 8      # dense sublane blocks when possible
    n_chunks = -(-rows // chunk_rows)     # ceil

    # RNG decisions mirror the PyTorch module: apply iff r <= erase_prob
    # (the module early-returns on `random.random() > erase_prob`), and the
    # chosen frame indices are DISTINCT (permutation prefix == random.sample).
    k_apply, k_sample = jax.random.split(key)
    apply = jax.random.uniform(k_apply, ()) <= erase_prob
    chosen = jax.random.permutation(k_sample, T)[:n_erase].astype(jnp.int32)
    ctrl = jnp.concatenate([apply.astype(jnp.int32)[None], chosen])  # [1 + n_erase]

    kernel = functools.partial(
        _erase_kernel,
        erase_value=erase_value,
        n_erase=n_erase,
        rows=rows,
        chunk_rows=chunk_rows,
        n_chunks=n_chunks,
    )

    out_r = pl.pallas_call(
        kernel,
        out_shape=jax.ShapeDtypeStruct(x_r.shape, x_r.dtype),
        grid_spec=pltpu.PrefetchScalarGridSpec(
            num_scalar_prefetch=1,
            grid=(1,),
            in_specs=[pl.BlockSpec(memory_space=pl.ANY)],
            out_specs=pl.BlockSpec(memory_space=pl.ANY),
            scratch_shapes=[
                pltpu.VMEM((chunk_rows, lane), x.dtype),
                pltpu.SemaphoreType.DMA((n_erase, n_chunks)),
            ],
        ),
        # ctrl is flat input 0 (scalar prefetch), x_r is flat input 1 -> alias
        # to output 0 so untouched frames never move through the chip.
        input_output_aliases={1: 0},
        compiler_params=pltpu.CompilerParams(
            dimension_semantics=("arbitrary",),
        ),
    )(ctrl, x_r)

    return out_r.reshape(orig_shape)


def _reference(x, key, *, erase_prob, num_frames_to_erase, erase_value):
    """Pure-JAX reference using the same RNG decisions as the kernel wrapper."""
    T = int(x.shape[0])
    n = min(int(num_frames_to_erase), T)
    k_apply, k_sample = jax.random.split(key)
    apply = jax.random.uniform(k_apply, ()) <= erase_prob
    chosen = jax.random.permutation(k_sample, T)[:n]
    mask = (jnp.arange(T)[:, None] == chosen[None, :]).any(axis=1)
    mask = jnp.logical_and(mask, apply)
    return jnp.where(mask[:, None, None, None], jnp.asarray(erase_value, x.dtype), x)


if __name__ == "__main__":
    root = jax.random.PRNGKey(0)
    k_data, k_mod1, k_mod2, k_data3, k_mod3 = jax.random.split(root, 5)

    # --- Test 1: lane-aligned frames (C*H*W % 128 == 0), erase always applies.
    T, C, H, W = 8, 4, 16, 16
    x = jax.random.normal(k_data, (T, C, H, W), dtype=jnp.float32)
    out = random_temporal_erasing(
        x, k_mod1, erase_prob=1.0, num_frames_to_erase=2, erase_value=0.0)
    out = jax.block_until_ready(out)
    ref = _reference(x, k_mod1, erase_prob=1.0, num_frames_to_erase=2, erase_value=0.0)
    assert out.shape == x.shape and out.dtype == x.dtype
    assert bool(jnp.array_equal(out, ref)), "mismatch vs reference (apply path)"

    # --- Test 2: skip path (apply flag == 0): aliased output must equal x.
    out2 = jax.block_until_ready(
        random_temporal_erasing(x, k_mod2, erase_prob=0.0, num_frames_to_erase=2))
    ref2 = _reference(x, k_mod2, erase_prob=0.0, num_frames_to_erase=2, erase_value=0.0)
    assert bool(jnp.array_equal(out2, ref2)), "mismatch vs reference (skip path)"

    # --- Test 3: frame size NOT divisible by 128 (fallback lane factorization).
    T3, C3, H3, W3 = 5, 3, 8, 10   # frame elems = 240 -> lane = 120
    x3 = jax.random.normal(k_data3, (T3, C3, H3, W3), dtype=jnp.float32)
    out3 = jax.block_until_ready(
        random_temporal_erasing(
            x3, k_mod3, erase_prob=1.0, num_frames_to_erase=1, erase_value=0.5))
    ref3 = _reference(x3, k_mod3, erase_prob=1.0, num_frames_to_erase=1, erase_value=0.5)
    assert bool(jnp.array_equal(out3, ref3)), "mismatch vs reference (odd frame size)"

    # --- Eval mode is the identity.
    assert random_temporal_erasing(x, k_mod1, training=False) is x

    print("KERNEL_OK")
</pallas_src>

<mosaic_0001>
module attributes {stable_mosaic.version = 11 : i64} {
  func.func @_erase_kernel(%arg0: i32, %arg1: memref<3xi32, #tpu.memory_space<smem>>, %arg2: memref<8x8x128xf32, #tpu.memory_space<any>>, %arg3: memref<8x8x128xf32, #tpu.memory_space<any>>, %arg4: memref<8x128xf32, #tpu.memory_space<vmem>>, %arg5: memref<2x1x!tpu.dma_semaphore, #tpu.memory_space<semaphore_mem>>) attributes {dimension_semantics = [#tpu.dimension_semantics<arbitrary>], iteration_bounds = array<i64: 1>, scalar_prefetch = 1 : i64, scratch_operands = 2 : i64, tpu.core_type = #tpu.core_type<tc>, window_params = [{}, {}]} {
    %c0 = arith.constant 0 : index
    %0 = memref.load %arg1[%c0] : memref<3xi32, #tpu.memory_space<smem>>
    %c0_i32 = arith.constant 0 : i32
    %1 = arith.cmpi sgt, %0, %c0_i32 : i32
    %2 = arith.extui %1 : i1 to i32
    %c0_i32_0 = arith.constant 0 : i32
    %3 = arith.cmpi ne, %2, %c0_i32_0 : i32
    scf.if %3 {
      %cst = arith.constant 0.000000e+00 : f32
      %4 = vector.broadcast %cst : f32 to vector<8x128xf32>
      %c0_1 = arith.constant 0 : index
      %c0_2 = arith.constant 0 : index
      %5 = vector.load %arg4[%c0_1, %c0_2] : memref<8x128xf32, #tpu.memory_space<vmem>>, vector<8x128xf32>
      tpu.vector_store %arg4[%c0_1, %c0_2], %4 {strides = array<i32>} : memref<8x128xf32, #tpu.memory_space<vmem>>, vector<8x128xf32>,
      %c1 = arith.constant 1 : index
      %6 = memref.load %arg1[%c1] : memref<3xi32, #tpu.memory_space<smem>>
      %c2 = arith.constant 2 : index
      %7 = memref.load %arg1[%c2] : memref<3xi32, #tpu.memory_space<smem>>
      %c0_i32_3 = arith.constant 0 : i32
      %c0_i32_4 = arith.constant 0 : i32
      %c0_i32_5 = arith.constant 0 : i32
      %c0_i32_6 = arith.constant 0 : i32
      %8 = tpu.memref_slice %arg4[%c0_i32_5, %c0_i32_6] : memref<8x128xf32, #tpu.memory_space<vmem>> -> memref<8x128xf32, #tpu.memory_space<vmem>>
      %c0_i32_7 = arith.constant 0 : i32
      %c0_i32_8 = arith.constant 0 : i32
      %9 = tpu.memref_slice %arg3[%6, %c0_i32_7, %c0_i32_8] : memref<8x8x128xf32, #tpu.memory_space<any>> -> memref<1x8x128xf32, #tpu.memory_space<any>>
      %10 = tpu.memref_squeeze %9 : memref<1x8x128xf32, #tpu.memory_space<any>> -> memref<8x128xf32, #tpu.memory_space<any>>
      %11 = tpu.memref_slice %arg5[%c0_i32_3, %c0_i32_4] : memref<2x1x!tpu.dma_semaphore, #tpu.memory_space<semaphore_mem>> -> memref<1x1x!tpu.dma_semaphore, #tpu.memory_space<semaphore_mem>>
      %12 = tpu.memref_squeeze %11 : memref<1x1x!tpu.dma_semaphore, #tpu.memory_space<semaphore_mem>> -> memref<!tpu.dma_semaphore, #tpu.memory_space<semaphore_mem>>
      tpu.enqueue_dma source(%8 : memref<8x128xf32, #tpu.memory_space<vmem>>) target(%10 : memref<8x128xf32, #tpu.memory_space<any>>) target_semaphore(%12 : memref<!tpu.dma_semaphore, #tpu.memory_space<semaphore_mem>>)
      %c1_i32 = arith.constant 1 : i32
      %c0_i32_9 = arith.constant 0 : i32
      %c0_i32_10 = arith.constant 0 : i32
      %c0_i32_11 = arith.constant 0 : i32
      %13 = tpu.memref_slice %arg4[%c0_i32_10, %c0_i32_11] : memref<8x128xf32, #tpu.memory_space<vmem>> -> memref<8x128xf32, #tpu.memory_space<vmem>>
      %c0_i32_12 = arith.constant 0 : i32
      %c0_i32_13 = arith.constant 0 : i32
      %14 = tpu.memref_slice %arg3[%7, %c0_i32_12, %c0_i32_13] : memref<8x8x128xf32, #tpu.memory_space<any>> -> memref<1x8x128xf32, #tpu.memory_space<any>>
      %15 = tpu.memref_squeeze %14 : memref<1x8x128xf32, #tpu.memory_space<any>> -> memref<8x128xf32, #tpu.memory_space<any>>
      %16 = tpu.memref_slice %arg5[%c1_i32, %c0_i32_9] : memref<2x1x!tpu.dma_semaphore, #tpu.memory_space<semaphore_mem>> -> memref<1x1x!tpu.dma_semaphore, #tpu.memory_space<semaphore_mem>>
      %17 = tpu.memref_squeeze %16 : memref<1x1x!tpu.dma_semaphore, #tpu.memory_space<semaphore_mem>> -> memref<!tpu.dma_semaphore, #tpu.memory_space<semaphore_mem>>
      tpu.enqueue_dma source(%13 : memref<8x128xf32, #tpu.memory_space<vmem>>) target(%15 : memref<8x128xf32, #tpu.memory_space<any>>) target_semaphore(%17 : memref<!tpu.dma_semaphore, #tpu.memory_space<semaphore_mem>>)
      %c0_i32_14 = arith.constant 0 : i32
      %c0_i32_15 = arith.constant 0 : i32
      %c0_i32_16 = arith.constant 0 : i32
      %c0_i32_17 = arith.constant 0 : i32
      %18 = tpu.memref_slice %arg4[%c0_i32_16, %c0_i32_17] : memref<8x128xf32, #tpu.memory_space<vmem>> -> memref<8x128xf32, #tpu.memory_space<vmem>>
      %c0_i32_18 = arith.constant 0 : i32
      %c0_i32_19 = arith.constant 0 : i32
      %19 = tpu.memref_slice %arg3[%6, %c0_i32_18, %c0_i32_19] : memref<8x8x128xf32, #tpu.memory_space<any>> -> memref<1x8x128xf32, #tpu.memory_space<any>>
      %20 = tpu.memref_squeeze %19 : memref<1x8x128xf32, #tpu.memory_space<any>> -> memref<8x128xf32, #tpu.memory_space<any>>
      %21 = tpu.memref_slice %arg5[%c0_i32_14, %c0_i32_15] : memref<2x1x!tpu.dma_semaphore, #tpu.memory_space<semaphore_mem>> -> memref<1x1x!tpu.dma_semaphore, #tpu.memory_space<semaphore_mem>>
      %22 = tpu.memref_squeeze %21 : memref<1x1x!tpu.dma_semaphore, #tpu.memory_space<semaphore_mem>> -> memref<!tpu.dma_semaphore, #tpu.memory_space<semaphore_mem>>
      tpu.wait_dma2 semaphore(%22 : memref<!tpu.dma_semaphore, #tpu.memory_space<semaphore_mem>>) src(%18 : memref<8x128xf32, #tpu.memory_space<vmem>>) dst(%20 : memref<8x128xf32, #tpu.memory_space<any>>)
      %c1_i32_20 = arith.constant 1 : i32
      %c0_i32_21 = arith.constant 0 : i32
      %c0_i32_22 = arith.constant 0 : i32
      %c0_i32_23 = arith.constant 0 : i32
      %23 = tpu.memref_slice %arg4[%c0_i32_22, %c0_i32_23] : memref<8x128xf32, #tpu.memory_space<vmem>> -> memref<8x128xf32, #tpu.memory_space<vmem>>
      %c0_i32_24 = arith.constant 0 : i32
      %c0_i32_25 = arith.constant 0 : i32
      %24 = tpu.memref_slice %arg3[%7, %c0_i32_24, %c0_i32_25] : memref<8x8x128xf32, #tpu.memory_space<any>> -> memref<1x8x128xf32, #tpu.memory_space<any>>
      %25 = tpu.memref_squeeze %24 : memref<1x8x128xf32, #tpu.memory_space<any>> -> memref<8x128xf32, #tpu.memory_space<any>>
      %26 = tpu.memref_slice %arg5[%c1_i32_20, %c0_i32_21] : memref<2x1x!tpu.dma_semaphore, #tpu.memory_space<semaphore_mem>> -> memref<1x1x!tpu.dma_semaphore, #tpu.memory_space<semaphore_mem>>
      %27 = tpu.memref_squeeze %26 : memref<1x1x!tpu.dma_semaphore, #tpu.memory_space<semaphore_mem>> -> memref<!tpu.dma_semaphore, #tpu.memory_space<semaphore_mem>>
      tpu.wait_dma2 semaphore(%27 : memref<!tpu.dma_semaphore, #tpu.memory_space<semaphore_mem>>) src(%23 : memref<8x128xf32, #tpu.memory_space<vmem>>) dst(%25 : memref<8x128xf32, #tpu.memory_space<any>>)
    } else {
    }
    return
  }
}

</mosaic_0001>

<llo_original>
// kernel: tpu_custom_call.1
$region0: #{tpu_custom_call.1}
  #allocation0 [shape = 'u32[]', space=smem, size = 0x4, offset = 0x4, fixed_abs, tag = 'smem constant byte address 0x4 - core index']
  #allocation1 [shape = 'u32[144,128]{1,0:T(1,128)}', space=vmem, size = 0x12000, scoped, tag = 'internal scratch']
  #allocation2 [shape = 'f32[8,128]{1,0:T(8,128)}', space=vmem, size = 0x1000, scoped, tag = 'scratch operand']
  #allocation3 [shape = 's32[2]{0}', space=sflag, size = 0x8, scoped, tag = 'scratch operand']
  #allocation4 [shape = 's32[1]{0}', space=sflag, size = 0x4, scoped, tag = 'scoped memory for tpu_custom_call.1']
  #allocation5 [shape = 'u8[512]{0}', space=smem, size = 0x200, scoped, tag = 'prefetched SMEM operand 0']
  #allocation6 [shape = 's32[]', space=sflag, size = 0x4, offset = 0, fixed_abs, tag = 'sflag constant byte address 0x0 - dummy sync flag']
  #allocation7 [shape = 's32[]', space=sflag, size = 0x4, offset = 0, fixed_abs, tag = 'sflag constant byte address 0x0 - dummy sync flag']
  #allocation8 [shape = 'u32[]', space=smem, size = 0x4, offset = 0x44, fixed_abs, tag = 'smem constant byte address 0x44 - assertion arg 0']
  #allocation9 [shape = 'u32[]', space=smem, size = 0x4, offset = 0x48, fixed_abs, tag = 'smem constant byte address 0x48 - assertion arg 1']
  #allocation10 [shape = 's32[]', space=sflag, size = 0x4, offset = 0, fixed_abs, tag = 'sflag constant byte address 0x0 - dummy sync flag']
  #allocation11 [shape = 's32[]', space=sflag, size = 0x4, offset = 0, fixed_abs, tag = 'sflag constant byte address 0x0 - dummy sync flag']
  %s0 = inlined_call_operand.vmem [shape: s32[3], index: 0, kind: input, shape index: {}]
  %s1 = inlined_call_operand.hbm [shape: f32[8,8,128], index: 1, kind: input, shape index: {}, may-alias: {1,2}]
  %s2 = inlined_call_operand.hbm [shape: f32[8,8,128], index: 2, kind: output, shape index: {}, may-alias: {1,2}]
  %s3 = sld [smem:[#allocation0]]
  $region14: #{tpu_custom_call.1} parent=0
    _
  %s5 = ssub.s32 1, %s3
  %s6 = scalar_select 0, %s5, %s3
  %s7 = sshll.u32 %s0, 4
  %s8 = int_to_ptr.vmem [resolvable:$true] %s7
  %10 = dma.vmem_to_smem %s8, 16, [#allocation5], [#allocation4]
  %11 = dma.done [#allocation4], 16
  %12 = sfence
  %s13 = sld [smem:[#allocation5]]
  %p14 = scmp.gt.s32.totalorder %s13, 0
  // Predicated region
  $region2: #{tpu_custom_call.1} parent=0 // pred_check
    %p15 = pneg %p14
  $region3: #{tpu_custom_call.1} parent=0 // pred_check_branch
    %17 = sbr.rel (%p15) target = $region5
  $region4: #{tpu_custom_call.1} parent=0 // pred_region
    %18 = vst [vmem:[#allocation2] sm:$0xff] 0.0
    %s19 = sld [smem:[#allocation5 + $0x1]]
    %s20 = sld [smem:[#allocation5 + $0x2]]
    %s21 = smul.u32 %s19, 8
    %s22 = smul.addr %s21, 16
    %s23 = scalar_lea.hbm %s2, %s22
    // Predicated region
    $region6: #{tpu_custom_call.1} parent=4 // pred_check
      _
    $region7: #{tpu_custom_call.1} parent=4 // pred_check_branch
      %25 = sbr.rel target = $region9
    $region8: #{tpu_custom_call.1} parent=4 // pred_region
      %26 = sst [smem:[#allocation8]] [#allocation7]
      %27 = sst [smem:[#allocation9]] [#allocation6]
    $region9: #{tpu_custom_call.1} parent=4 // pred_fallthru
      _
    %29 = shalt.err (0)
    %s31 = sshll.u32 [#allocation2], 4
    %s32 = int_to_ptr.vmem [resolvable:$true] %s31
    %34 = dma.vmem_to_hbm [thread:$0]  %s32, 128, %s23, [#allocation3]
    %s35 = smul.u32 %s20, 8
    %s36 = smul.addr %s35, 16
    %s37 = scalar_lea.hbm %s2, %s36
    %s38 = scalar_lea.sflag [#allocation3], 1
    // Predicated region
    $region10: #{tpu_custom_call.1} parent=4 // pred_check
      _
    $region11: #{tpu_custom_call.1} parent=4 // pred_check_branch
      %40 = sbr.rel target = $region13
    $region12: #{tpu_custom_call.1} parent=4 // pred_region
      %41 = sst [smem:[#allocation8]] [#allocation11]
      %42 = sst [smem:[#allocation9]] [#allocation10]
    $region13: #{tpu_custom_call.1} parent=4 // pred_fallthru
      _
    %44 = shalt.err (0)
    %s46 = sshll.u32 [#allocation2], 4
    %s47 = int_to_ptr.vmem [resolvable:$true] %s46
    %49 = dma.vmem_to_hbm [thread:$0]  %s47, 128, %s37, %s38
    %s50 = smul.u32 8, 1
    %s51 = sshll.u32 %s50, 4
    %52 = dma.done [#allocation3], %s51
    %s53 = sshll.u32 %s50, 4
    %54 = dma.done %s38, %s53
  $region5: #{tpu_custom_call.1} parent=0 // pred_fallthru
    _
  %55 = vsyncmov [#allocation3]
  %s56 = vpop.sfrf %55
  %p57 = scmp.eq.s32.totalorder %s56, 0
  %p58 = pneg %p57
  %60 = shalt.err (%p58)
  %s61 = scalar_lea.sflag [#allocation3], 1
  %62 = vsyncmov %s61
  %s63 = vpop.sfrf %62
  %p64 = scmp.eq.s32.totalorder %s63, 0
  %p65 = pneg %p64
  %67 = shalt.err (%p65)

</llo_original>
